<compile_context>
chip_gen: v7x
topology: tpu7x:2x2x1
jax: 0.10.0
libtpu: 0.0.40
codegen_flags: <defaults>
</compile_context>

<pallas_src>
import functools

import numpy as np

import jax
import jax.numpy as jnp
from jax.experimental import pallas as pl
from jax.experimental.pallas import tpu as pltpu


# ----------------------------- hyp (synthetic) ------------------------------
TOUCH_EMB_DIM = 32            # hyp.touch_emb_dim
EMB_2D_TOUCH_L2_COEFF = 1.0   # hyp.emb_2D_touch_l2_coeff
EMB_2D_TOUCH_NUM_SAMPLES = 2  # hyp.emb_2D_touch_num_samples (unused: do_ml=False)


# ------------------------------ Pallas kernel -------------------------------
def _fused_forward_kernel(cols_ref, w_ref, f_ref, emb_ref, loss_ref, *,
                          batch, hw2, c1, c2, k1pad, emb_w,
                          mse_scale, sq_eps):
    """Whole Feat2d + l2norm + MSE forward; all intermediates stay in VMEM.

    cols_ref : (M2, k1pad)        bf16  composed conv1/conv2 patch matrix
    w_ref    : (k1pad+9*c1+c2, W) bf16  packed weights (block-diag conv1,
                                        conv2 im2col weight, FC weight)
    f_ref    : (>=2+B, 128)       f32   packed b2 / b_fc / sampled embeddings
    """
    kc = 9 * c1                       # conv2 contraction width (tap, c1)
    r1 = k1pad                        # end of conv1 block-diag weight rows
    r2 = r1 + kc                      # end of conv2 weight rows
    r3 = r2 + c2                      # end of FC weight rows

    # conv1 (3x3,s2,p1) evaluated for every conv2 tap position in ONE matmul.
    # Bias + conv2 zero-padding come via the augmented bias/mask column folded
    # into the block-diagonal weight, so padded taps are exactly 0 after ReLU.
    cols2 = jnp.dot(cols_ref[...], w_ref[0:r1, 0:kc],
                    preferred_element_type=jnp.float32)          # (M2, 9*C1)
    cols2 = jnp.maximum(cols2, 0.0).astype(jnp.bfloat16)

    # conv2 (3x3,s2,p1): the single real im2col weight matmul.
    h2 = jnp.dot(cols2, w_ref[r1:r2, 0:c2],
                 preferred_element_type=jnp.float32) + f_ref[0:1, 0:c2]
    h2 = jnp.maximum(h2, 0.0)                                    # (M2, C2) f32

    # Global mean pool: per-image sublane reduction (XLU) — no f32 matmul,
    # no pooling matrix.  Row blocks are static and 8-aligned.
    pooled = jnp.concatenate(
        [jnp.sum(h2[b * hw2:(b + 1) * hw2, :], axis=0, keepdims=True)
         for b in range(batch)], axis=0) * (1.0 / float(hw2))    # (B, C2) f32

    # FC to a lane-dense padded embedding width (padded lanes stay exactly 0).
    feats = jnp.dot(pooled.astype(jnp.bfloat16), w_ref[r2:r3, 0:emb_w],
                    preferred_element_type=jnp.float32) + f_ref[1:2, 0:emb_w]

    # l2-normalize rows: rsqrt on the EUP; clamp the squared norm at eps^2
    # to keep F.normalize(eps=1e-12) semantics.
    sumsq = jnp.sum(feats * feats, axis=1, keepdims=True)
    emb = feats * jax.lax.rsqrt(jnp.maximum(sumsq, sq_eps))
    emb_ref[...] = emb

    # MSE vs sampled embeddings (padded lanes are zero on both sides); the
    # loss coefficient and the real-element mean divisor are folded in.
    diff = emb - f_ref[2:2 + batch, 0:emb_w]
    loss_ref[...] = jnp.sum(diff * diff, keepdims=True) * mse_scale


# ---------------------------------- glue ------------------------------------
def _conv_out(n, k=3, s=2, p=1):
    return (n + 2 * p - k) // s + 1


@functools.lru_cache(maxsize=None)
def _composed_gather(B, Cin, H, W):
    """Static (numpy, trace-time) composed conv1-im2col o conv2-im2col gather.

    Returns:
      idx  (M2, KTOTP) int32 : flat-NHWC input index per patch entry
                               (points at an appended zero slot for padding).
      ones (M2, KTOTP) f32   : 1.0 in each tap's bias/mask column iff the
                               conv1 output position feeding that tap exists
                               (i.e. it is not conv2 zero-padding).
    """
    H1, W1 = _conv_out(H), _conv_out(W)
    OH2, OW2 = _conv_out(H1), _conv_out(W1)
    K1 = 9 * Cin + 1                       # per-tap conv1 patch + bias column
    KTOT = 9 * K1
    KTOTP = ((KTOT + 15) // 16) * 16       # pad K to a bf16-friendly multiple
    M2 = B * OH2 * OW2
    zero_slot = B * H * W * Cin
    idx = np.full((M2, KTOTP), zero_slot, np.int32)
    ones = np.zeros((M2, KTOTP), np.float32)
    for b in range(B):
        for oy in range(OH2):
            for ox in range(OW2):
                m = (b * OH2 + oy) * OW2 + ox
                for ki in range(3):
                    for kj in range(3):
                        t = ki * 3 + kj
                        y1 = 2 * oy + ki - 1
                        x1 = 2 * ox + kj - 1
                        if not (0 <= y1 < H1 and 0 <= x1 < W1):
                            continue                   # conv2 zero padding
                        ones[m, t * K1 + 9 * Cin] = 1.0   # bias/mask column
                        for di in range(3):
                            for dj in range(3):
                                yy = 2 * y1 + di - 1
                                xx = 2 * x1 + dj - 1
                                if not (0 <= yy < H and 0 <= xx < W):
                                    continue           # conv1 zero padding
                                base = ((b * H + yy) * W + xx) * Cin
                                col = t * K1 + (di * 3 + dj) * Cin
                                for c in range(Cin):
                                    idx[m, col + c] = base + c
    return idx, ones, (H1, W1, OH2, OW2, K1, KTOTP, M2)


def init_params(key, in_ch=1, emb_dim=TOUCH_EMB_DIM):
    """Deterministic synthetic Feat2d parameters (nonzero biases on purpose)."""
    k1, k2, k3, k4, k5, k6 = jax.random.split(key, 6)
    c1, c2 = 32, 64
    w1 = jax.random.normal(k1, (3 * 3 * in_ch, c1), jnp.float32) / jnp.sqrt(9.0 * in_ch)
    b1 = 0.1 * jax.random.normal(k4, (c1,), jnp.float32)
    w2 = jax.random.normal(k2, (3 * 3 * c1, c2), jnp.float32) / jnp.sqrt(9.0 * c1)
    b2 = 0.1 * jax.random.normal(k5, (c2,), jnp.float32)
    w_fc = jax.random.normal(k3, (c2, emb_dim), jnp.float32) / jnp.sqrt(float(c2))
    b_fc = 0.1 * jax.random.normal(k6, (emb_dim,), jnp.float32)
    return dict(w1=w1, b1=b1, w2=w2, b2=b2, w_fc=w_fc, b_fc=b_fc,
                c1=c1, c2=c2, emb_dim=emb_dim)


def touch_embnet2dml_forward(params, sensor_imgs_nchw, sampled_embeddings,
                             do_ml=False):
    """Returns (total_loss scalar, sensor_embeddings (B, C, 1, 1))."""
    assert not do_ml  # TODO(synk): margin-loss/do_ml branch not translated.
    B, Cin, H, W = sensor_imgs_nchw.shape
    c1, c2, emb_dim = params["c1"], params["c2"], params["emb_dim"]
    emb_w = ((emb_dim + 127) // 128) * 128          # lane-dense output width

    idx, ones, (H1, W1, OH2, OW2, K1, KTOTP, M2) = _composed_gather(B, Cin, H, W)
    hw2 = OH2 * OW2

    # ---- activation slab: composed conv1/conv2 im2col via ONE static gather.
    x_flat = jnp.transpose(sensor_imgs_nchw, (0, 2, 3, 1)).reshape(-1).astype(jnp.float32)
    x_flat = jnp.concatenate([x_flat, jnp.zeros((1,), jnp.float32)])  # zero slot
    cols1_wide = (x_flat[jnp.asarray(idx)] + jnp.asarray(ones)).astype(jnp.bfloat16)

    # ---- bf16 weight slab: block-diag augmented conv1, conv2 im2col, FC ----
    # (packed once; in-kernel reads are static, aligned ref slices).
    w1_aug = jnp.concatenate([params["w1"], params["b1"].reshape(1, c1)], axis=0)  # (K1, C1)
    w1_block = jnp.kron(jnp.eye(9, dtype=jnp.float32), w1_aug)                     # (9*K1, 9*C1)
    slab_w = max(9 * c1, emb_w, c2)
    r1, r2, r3 = KTOTP, KTOTP + 9 * c1, KTOTP + 9 * c1 + c2
    wslab = jnp.zeros((r3, slab_w), jnp.bfloat16)
    wslab = wslab.at[0:9 * K1, 0:9 * c1].set(w1_block.astype(jnp.bfloat16))
    wslab = wslab.at[r1:r2, 0:c2].set(params["w2"].astype(jnp.bfloat16))
    wslab = wslab.at[r2:r3, 0:emb_dim].set(params["w_fc"].astype(jnp.bfloat16))

    # ---- f32 vector slab: b2 / b_fc / sampled embeddings (one DMA) ----------
    fs_rows = max(8, 2 + B)
    fslab = jnp.zeros((fs_rows, max(emb_w, c2)), jnp.float32)
    fslab = fslab.at[0, 0:c2].set(params["b2"].astype(jnp.float32))
    fslab = fslab.at[1, 0:emb_dim].set(params["b_fc"].astype(jnp.float32))
    fslab = fslab.at[2:2 + B, 0:emb_dim].set(sampled_embeddings.astype(jnp.float32))

    kernel = functools.partial(
        _fused_forward_kernel,
        batch=B, hw2=hw2, c1=c1, c2=c2, k1pad=KTOTP, emb_w=emb_w,
        # loss coeff and MSE mean divisor over REAL elements only (padded
        # lanes contribute exact zeros) folded into one scale.
        mse_scale=float(EMB_2D_TOUCH_L2_COEFF) / float(B * emb_dim),
        sq_eps=1e-24,   # == F.normalize eps (1e-12) squared
    )

    vmem = pltpu.MemorySpace.VMEM
    emb_pad, loss = pl.pallas_call(
        kernel,
        out_shape=(
            jax.ShapeDtypeStruct((B, emb_w), jnp.float32),
            jax.ShapeDtypeStruct((1, 1), jnp.float32),
        ),
        in_specs=[pl.BlockSpec(memory_space=vmem)] * 3,
        out_specs=(
            pl.BlockSpec(memory_space=vmem),
            pl.BlockSpec(memory_space=vmem),
        ),
    )(cols1_wide, wslab, fslab)

    total_loss = loss[0, 0]                          # utils_misc.add_loss
    # Reference reshapes 2-D embeddings to (B, C, 1, 1) before returning.
    sensor_embeddings = emb_pad[:, :emb_dim].reshape(B, emb_dim, 1, 1)
    return total_loss, sensor_embeddings


# -------------------- pure-JAX reference (for validation) -------------------
def reference_forward(params, x_nchw, sampled):
    """Same math via XLA convs, with bf16 rounding at the same points."""
    f32, bf16 = jnp.float32, jnp.bfloat16
    rbf = lambda a: a.astype(bf16).astype(f32)
    c1, c2 = params["c1"], params["c2"]
    cin = x_nchw.shape[1]
    dn = ("NHWC", "HWIO", "NHWC")
    x = rbf(jnp.transpose(x_nchw, (0, 2, 3, 1)))
    h1 = jax.lax.conv_general_dilated(
        x, rbf(params["w1"]).reshape(3, 3, cin, c1), (2, 2), ((1, 1), (1, 1)),
        dimension_numbers=dn) + rbf(params["b1"])
    h1 = rbf(jnp.maximum(h1, 0.0))
    h2 = jax.lax.conv_general_dilated(
        h1, rbf(params["w2"]).reshape(3, 3, c1, c2), (2, 2), ((1, 1), (1, 1)),
        dimension_numbers=dn) + params["b2"]
    h2 = jnp.maximum(h2, 0.0)
    pooled = jnp.mean(h2, axis=(1, 2))
    feats = jnp.dot(pooled.astype(bf16), params["w_fc"].astype(bf16),
                    preferred_element_type=f32) + params["b_fc"]
    emb = feats * jax.lax.rsqrt(
        jnp.maximum(jnp.sum(feats * feats, axis=1, keepdims=True), 1e-24))
    loss = EMB_2D_TOUCH_L2_COEFF * jnp.mean((emb - sampled) ** 2)
    return loss, emb


# ----------------------------------- main ------------------------------------
if __name__ == "__main__":
    key = jax.random.PRNGKey(0)
    k_param, k_img, k_samp = jax.random.split(key, 3)

    B, C_in, H, W = 2, 1, 16, 16
    params = init_params(k_param, in_ch=C_in, emb_dim=TOUCH_EMB_DIM)

    sensor_imgs = jax.random.normal(k_img, (B, C_in, H, W), jnp.float32)
    sampled = jax.random.normal(k_samp, (B, TOUCH_EMB_DIM), jnp.float32)
    # sampled embeddings are unit-normalized upstream in the pipeline
    sampled = sampled / jnp.maximum(
        jnp.sqrt(jnp.sum(sampled * sampled, axis=1, keepdims=True)), 1e-12)

    fwd = jax.jit(functools.partial(touch_embnet2dml_forward, params))
    total_loss, sensor_embeddings = fwd(sensor_imgs, sampled)
    jax.block_until_ready((total_loss, sensor_embeddings))

    assert sensor_embeddings.shape == (B, TOUCH_EMB_DIM, 1, 1)
    assert total_loss.shape == ()
    assert bool(jnp.isfinite(total_loss))

    # Validate against a pure-JAX/XLA reference (same bf16 rounding points;
    # remaining differences are f32 accumulation order -> tight tolerance).
    ref_loss, ref_emb = reference_forward(params, sensor_imgs, sampled)
    np.testing.assert_allclose(
        np.asarray(sensor_embeddings.reshape(B, TOUCH_EMB_DIM)),
        np.asarray(ref_emb), atol=5e-3, rtol=5e-3)
    np.testing.assert_allclose(
        np.asarray(total_loss), np.asarray(ref_loss), atol=5e-3, rtol=5e-3)

    print("KERNEL_OK")
</pallas_src>

<mosaic_0001>
module attributes {stable_mosaic.version = 11 : i64} {
  func.func @_fused_forward_kernel(%arg0: memref<32x96xbf16, #tpu.memory_space<vmem>>, %arg1: memref<448x288xbf16, #tpu.memory_space<vmem>>, %arg2: memref<8x128xf32, #tpu.memory_space<vmem>>, %arg3: memref<2x128xf32, #tpu.memory_space<vmem>>, %arg4: memref<1x1xf32, #tpu.memory_space<vmem>>) attributes {dimension_semantics = [], scalar_prefetch = 0 : i64, scratch_operands = 0 : i64, tpu.core_type = #tpu.core_type<tc>} {
    %c0 = arith.constant 0 : index
    %c0_0 = arith.constant 0 : index
    %0 = vector.load %arg0[%c0, %c0_0] : memref<32x96xbf16, #tpu.memory_space<vmem>>, vector<32x96xbf16>
    %c0_1 = arith.constant 0 : index
    %c0_2 = arith.constant 0 : index
    %1 = vector.load %arg1[%c0_1, %c0_2] : memref<448x288xbf16, #tpu.memory_space<vmem>>, vector<96x288xbf16>
    %cst = arith.constant dense<0.000000e+00> : vector<32x288xf32>
    %2 = tpu.matmul %0, %1, %cst {dimension_numbers = #tpu.dot_dimension_numbers<[1], [0], [0], [1], [0, 0, 1, 1], [], []>} : vector<32x96xbf16>, vector<96x288xbf16>, vector<32x288xf32> -> vector<32x288xf32>
    %cst_3 = arith.constant 0.000000e+00 : f32
    %3 = vector.broadcast %cst_3 : f32 to vector<32x288xf32>
    %4 = arith.maximumf %2, %3 : vector<32x288xf32>
    %5 = arith.truncf %4 : vector<32x288xf32> to vector<32x288xbf16>
    %c96 = arith.constant 96 : index
    %c0_4 = arith.constant 0 : index
    %6 = vector.load %arg1[%c96, %c0_4] : memref<448x288xbf16, #tpu.memory_space<vmem>>, vector<288x64xbf16>
    %cst_5 = arith.constant dense<0.000000e+00> : vector<32x64xf32>
    %7 = tpu.matmul %5, %6, %cst_5 {dimension_numbers = #tpu.dot_dimension_numbers<[1], [0], [0], [1], [0, 0, 1, 1], [], []>} : vector<32x288xbf16>, vector<288x64xbf16>, vector<32x64xf32> -> vector<32x64xf32>
    %c0_6 = arith.constant 0 : index
    %c0_7 = arith.constant 0 : index
    %8 = vector.load %arg2[%c0_6, %c0_7] : memref<8x128xf32, #tpu.memory_space<vmem>>, vector<1x64xf32>
    %9 = vector.broadcast %8 : vector<1x64xf32> to vector<32x64xf32>
    %10 = arith.addf %7, %9 : vector<32x64xf32>
    %cst_8 = arith.constant 0.000000e+00 : f32
    %11 = vector.broadcast %cst_8 : f32 to vector<32x64xf32>
    %12 = arith.maximumf %10, %11 : vector<32x64xf32>
    %13 = vector.extract_strided_slice %12 {offsets = [0, 0], sizes = [16, 64], strides = [1, 1]} : vector<32x64xf32> to vector<16x64xf32>
    %cst_9 = arith.constant dense<0.000000e+00> : vector<64xf32>
    %14 = vector.multi_reduction <add>, %13, %cst_9 [0] : vector<16x64xf32> to vector<64xf32>
    %15 = vector.shape_cast %14 : vector<64xf32> to vector<1x64xf32>
    %16 = vector.extract_strided_slice %12 {offsets = [16, 0], sizes = [16, 64], strides = [1, 1]} : vector<32x64xf32> to vector<16x64xf32>
    %cst_10 = arith.constant dense<0.000000e+00> : vector<64xf32>
    %17 = vector.multi_reduction <add>, %16, %cst_10 [0] : vector<16x64xf32> to vector<64xf32>
    %18 = vector.shape_cast %17 : vector<64xf32> to vector<1x64xf32>
    %19 = tpu.concatenate %15, %18 in 0 : vector<1x64xf32>, vector<1x64xf32> -> vector<2x64xf32>
    %cst_11 = arith.constant 6.250000e-02 : f32
    %20 = vector.broadcast %cst_11 : f32 to vector<2x64xf32>
    %21 = arith.mulf %19, %20 : vector<2x64xf32>
    %22 = arith.truncf %21 : vector<2x64xf32> to vector<2x64xbf16>
    %c384 = arith.constant 384 : index
    %c0_12 = arith.constant 0 : index
    %23 = vector.load %arg1[%c384, %c0_12] : memref<448x288xbf16, #tpu.memory_space<vmem>>, vector<64x128xbf16>
    %cst_13 = arith.constant dense<0.000000e+00> : vector<2x128xf32>
    %24 = tpu.matmul %22, %23, %cst_13 {dimension_numbers = #tpu.dot_dimension_numbers<[1], [0], [0], [1], [0, 0, 1, 1], [], []>} : vector<2x64xbf16>, vector<64x128xbf16>, vector<2x128xf32> -> vector<2x128xf32>
    %c1 = arith.constant 1 : index
    %c0_14 = arith.constant 0 : index
    %25 = vector.load %arg2[%c1, %c0_14] : memref<8x128xf32, #tpu.memory_space<vmem>>, vector<1x128xf32>
    %26 = vector.broadcast %25 : vector<1x128xf32> to vector<2x128xf32>
    %27 = arith.addf %24, %26 : vector<2x128xf32>
    %28 = arith.mulf %27, %27 : vector<2x128xf32>
    %cst_15 = arith.constant dense<0.000000e+00> : vector<2xf32>
    %29 = vector.multi_reduction <add>, %28, %cst_15 [1] : vector<2x128xf32> to vector<2xf32>
    %30 = vector.shape_cast %29 : vector<2xf32> to vector<2x1xf32>
    %cst_16 = arith.constant 1.000000e-24 : f32
    %31 = vector.broadcast %cst_16 : f32 to vector<2x1xf32>
    %32 = arith.maximumf %30, %31 : vector<2x1xf32>
    %33 = math.rsqrt %32 : vector<2x1xf32>
    %34 = vector.broadcast %33 : vector<2x1xf32> to vector<2x128xf32>
    %35 = arith.mulf %27, %34 : vector<2x128xf32>
    %c0_17 = arith.constant 0 : index
    %c0_18 = arith.constant 0 : index
    %36 = vector.load %arg3[%c0_17, %c0_18] : memref<2x128xf32, #tpu.memory_space<vmem>>, vector<2x128xf32>
    tpu.vector_store %arg3[%c0_17, %c0_18], %35 {strides = array<i32>} : memref<2x128xf32, #tpu.memory_space<vmem>>, vector<2x128xf32>,
    %c2 = arith.constant 2 : index
    %c0_19 = arith.constant 0 : index
    %37 = vector.load %arg2[%c2, %c0_19] : memref<8x128xf32, #tpu.memory_space<vmem>>, vector<2x128xf32>
    %38 = arith.subf %35, %37 : vector<2x128xf32>
    %39 = arith.mulf %38, %38 : vector<2x128xf32>
    %40 = vector.shape_cast %39 : vector<2x128xf32> to vector<1x2x128xf32>
    %cst_20 = arith.constant dense<0.000000e+00> : vector<1xf32>
    %41 = vector.multi_reduction <add>, %40, %cst_20 [1, 2] : vector<1x2x128xf32> to vector<1xf32>
    %42 = vector.shape_cast %41 : vector<1xf32> to vector<1x1x1xf32>
    %43 = vector.extract %42[0, 0, 0] : f32 from vector<1x1x1xf32>
    %44 = vector.broadcast %43 : f32 to vector<1x1xf32>
    %cst_21 = arith.constant 1.562500e-02 : f32
    %45 = vector.broadcast %cst_21 : f32 to vector<1x1xf32>
    %46 = arith.mulf %44, %45 : vector<1x1xf32>
    %c0_22 = arith.constant 0 : index
    %c0_23 = arith.constant 0 : index
    %47 = vector.load %arg4[%c0_22, %c0_23] : memref<1x1xf32, #tpu.memory_space<vmem>>, vector<1x1xf32>
    tpu.vector_store %arg4[%c0_22, %c0_23], %46 {strides = array<i32>} : memref<1x1xf32, #tpu.memory_space<vmem>>, vector<1x1xf32>,
    return
  }
}

</mosaic_0001>

<llo_original>
// kernel: touch_embnet2dml_forward.1
$region0: #{touch_embnet2dml_forward.1}
  #allocation0 [shape = 'u32[]', space=smem, size = 0x4, offset = 0x4, fixed_abs, tag = 'smem constant byte address 0x4 - core index']
  #allocation1 [shape = 'u32[144,128]{1,0:T(1,128)}', space=vmem, size = 0x12000, scoped, tag = 'internal scratch']
  %s0 = inlined_call_operand.vmem [shape: bf16[32,96], index: 0, kind: input, shape index: {}]
  %s1 = inlined_call_operand.vmem [shape: bf16[448,288], index: 1, kind: input, shape index: {}]
  %s2 = inlined_call_operand.vmem [shape: f32[8,128], index: 2, kind: input, shape index: {}]
  %s3 = inlined_call_operand.hbm [shape: f32[2,128], index: 3, kind: output, shape index: {0}]
  %s4 = inlined_call_operand.hbm [shape: f32[1,1], index: 4, kind: output, shape index: {1}]
  %5 = xla_tuple %s3, %s4
  %s6 = sld [smem:[#allocation0]]
  $region30: #{touch_embnet2dml_forward.1} parent=0
    _
  %s8 = ssub.s32 1, %s6
  %s9 = scalar_select 0, %s8, %s6
  $region1: #{touch_embnet2dml_forward.1} parent=0
    #allocation2 [shape = 'u8[1024]{0}', space=vmem, size = 0x400, scoped, tag = 'output window, operand 0, single buffered']
    #allocation3 [shape = 's32[1]{0}', space=sflag, size = 0x4, scoped, tag = 'scoped memory for touch_embnet2dml_forward.1']
    #allocation4 [shape = 'u8[512]{0}', space=vmem, size = 0x400, scoped, tag = 'output window, operand 1, single buffered']
    #allocation5 [shape = 's32[1]{0}', space=sflag, size = 0x4, scoped, tag = 'scoped memory for touch_embnet2dml_forward.1']
    %10 = vsyncpa [#allocation3], 0
    %11 = vsyncpa [#allocation5], 0
    // Predicated region
    $region2: #{touch_embnet2dml_forward.1} parent=1 // pred_check
      _
    $region3: #{touch_embnet2dml_forward.1} parent=1 // pred_check_branch
      %13 = sbr.rel (0) target = $region5
    $region4: #{touch_embnet2dml_forward.1} parent=1 // pred_region
      _
    $region5: #{touch_embnet2dml_forward.1} parent=1 // pred_fallthru
      _
    // Predicated region
    $region6: #{touch_embnet2dml_forward.1} parent=1 // pred_check
      _
    $region7: #{touch_embnet2dml_forward.1} parent=1 // pred_check_branch
      %15 = sbr.rel (0) target = $region9
    $region8: #{touch_embnet2dml_forward.1} parent=1 // pred_region
      _
    $region9: #{touch_embnet2dml_forward.1} parent=1 // pred_fallthru
      _
    // Predicated region
    $region10: #{touch_embnet2dml_forward.1} parent=1 // pred_check
      _
    $region11: #{touch_embnet2dml_forward.1} parent=1 // pred_check_branch
      %17 = sbr.rel (0) target = $region13
    $region12: #{touch_embnet2dml_forward.1} parent=1 // pred_region
      _
    $region13: #{touch_embnet2dml_forward.1} parent=1 // pred_fallthru
      _
    %v19 = vld [vmem:[%s0] sm:$0xf]
    %v20 = vld [vmem:[%s0 + $0x4] sm:$0xf]
    %v21 = vld [vmem:[%s0 + $0x8] sm:$0xf]
    %v22 = vld [vmem:[%s0 + $0xc] sm:$0xf]
    %v23 = vld [vmem:[%s1] sm:$0xff]
    %v24 = vld [vmem:[%s1 + $0x8] sm:$0xf]
    %v25 = vld [vmem:[%s1 + $0xc] sm:$0xff]
    %v26 = vld [vmem:[%s1 + $0x14] sm:$0xf]
    %v27 = vld [vmem:[%s1 + $0x18] sm:$0xff]
    %v28 = vld [vmem:[%s1 + $0x20] sm:$0xf]
    %v29 = vld [vmem:[%s1 + $0x24] sm:$0xff]
    %v30 = vld [vmem:[%s1 + $0x2c] sm:$0xf]
    %v31 = vld [vmem:[%s1 + $0x30] sm:$0xff]
    %v32 = vld [vmem:[%s1 + $0x38] sm:$0xf]
    %v33 = vld [vmem:[%s1 + $0x3c] sm:$0xff]
    %v34 = vld [vmem:[%s1 + $0x44] sm:$0xf]
    %v35 = vld [vmem:[%s1 + $0x48] sm:$0xff]
    %v36 = vld [vmem:[%s1 + $0x50] sm:$0xf]
    %v37 = vld [vmem:[%s1 + $0x54] sm:$0xff]
    %v38 = vld [vmem:[%s1 + $0x5c] sm:$0xf]
    %v39 = vld [vmem:[%s1 + $0x60] sm:$0xff]
    %v40 = vld [vmem:[%s1 + $0x68] sm:$0xf]
    %v41 = vld [vmem:[%s1 + $0x6c] sm:$0xff]
    %v42 = vld [vmem:[%s1 + $0x74] sm:$0xf]
    %v43 = vld [vmem:[%s1 + $0x78] sm:$0xff]
    %v44 = vld [vmem:[%s1 + $0x80] sm:$0xf]
    %v45 = vld [vmem:[%s1 + $0x84] sm:$0xff]
    %v46 = vld [vmem:[%s1 + $0x8c] sm:$0xf]
    %v51 = vunpack.c.l.b16 %v19
    %v52 = vunpack.c.l.b16 %v20
    %v53 = vunpack.c.l.b16 %v21
    %v54 = vunpack.c.l.b16 %v22
    %v55 = vpack.c.b16 %v52, %v51
    %v56 = vpack.c.b16 %v54, %v53
    %v81 = vunpack.c.l.b16 %v23
    %v82 = vunpack.c.h.b16 %v23
    %v83 = vunpack.c.l.b16 %v24
    %v84 = vunpack.c.l.b16 %v25
    %v85 = vunpack.c.h.b16 %v25
    %v86 = vunpack.c.l.b16 %v26
    %v87 = vunpack.c.l.b16 %v27
    %v88 = vunpack.c.h.b16 %v27
    %v89 = vunpack.c.l.b16 %v28
    %v90 = vunpack.c.l.b16 %v29
    %v91 = vunpack.c.h.b16 %v29
    %v92 = vunpack.c.l.b16 %v30
    %v93 = vunpack.c.l.b16 %v31
    %v94 = vunpack.c.h.b16 %v31
    %v95 = vunpack.c.l.b16 %v32
    %v96 = vunpack.c.l.b16 %v33
    %v97 = vunpack.c.h.b16 %v33
    %v98 = vunpack.c.l.b16 %v34
    %v99 = vunpack.c.l.b16 %v35
    %v100 = vunpack.c.h.b16 %v35
    %v101 = vunpack.c.l.b16 %v36
    %v102 = vunpack.c.l.b16 %v37
    %v103 = vunpack.c.h.b16 %v37
    %v104 = vunpack.c.l.b16 %v38
    %v105 = vunpack.c.l.b16 %v39
    %v106 = vunpack.c.h.b16 %v39
    %v107 = vunpack.c.l.b16 %v40
    %v108 = vunpack.c.l.b16 %v41
    %v109 = vunpack.c.h.b16 %v41
    %v110 = vunpack.c.l.b16 %v42
    %v111 = vunpack.c.l.b16 %v43
    %v112 = vunpack.c.h.b16 %v43
    %v113 = vunpack.c.l.b16 %v44
    %v114 = vunpack.c.l.b16 %v45
    %v115 = vunpack.c.h.b16 %v45
    %v116 = vunpack.c.l.b16 %v46
    %v117 = vpack.c.b16 %v84, %v81
    %v118 = vpack.c.b16 %v85, %v82
    %v119 = vpack.c.b16 %v86, %v83
    %v120 = vpack.c.b16 %v90, %v87
    %v121 = vpack.c.b16 %v91, %v88
    %v122 = vpack.c.b16 %v92, %v89
    %v123 = vpack.c.b16 %v96, %v93
    %v124 = vpack.c.b16 %v97, %v94
    %v125 = vpack.c.b16 %v98, %v95
    %v126 = vpack.c.b16 %v102, %v99
    %v127 = vpack.c.b16 %v103, %v100
    %v128 = vpack.c.b16 %v104, %v101
    %v129 = vpack.c.b16 %v108, %v105
    %v130 = vpack.c.b16 %v109, %v106
    %v131 = vpack.c.b16 %v110, %v107
    %v132 = vpack.c.b16 %v114, %v111
    %v133 = vpack.c.b16 %v115, %v112
    %v134 = vpack.c.b16 %v116, %v113
    %vm153 = vcmask 785408
    %v155 = vsel %vm153, %v55, 0
    %v158 = vsel %vm153, %v56, 0
    %160 = vmatprep.subr.bf16.mxu0 %v118
    %161 = vmatpush1.bf16.msra.mxu0 %v117
    %162 = vmatprep.subr.bf16.mxu0 %v121
    %163 = vmatpush1.bf16.msra.mxu0 %v120
    %164 = vmatprep.subr.bf16.mxu0 %v124
    %165 = vmatpush1.bf16.msra.mxu0 %v123
    %166 = vmatprep.subr.bf16.mxu0 %v127
    %167 = vmatpush1.bf16.msra.mxu0 %v126
    %168 = vmatprep.subr.bf16.mxu0 %v130
    %169 = vmatpush1.bf16.msra.mxu0 %v129
    %170 = vmatprep.subr.bf16.mxu0 %v133
    %171 = vmatpush1.bf16.msra.mxu0 %v132
    %172 = vmatprep.subr.bf16.mxu0 0
    %173 = vmatpush1.bf16.msra.mxu0 0
    %174 = vmatprep.subr.bf16.mxu0 0
    %175 = vmatpush1.bf16.msra.mxu0 0
    %176 = vmatprep.subr.bf16.mxu0 0
    %177 = vmatpush1.bf16.msra.mxu0 0
    %178 = vmatprep.subr.bf16.mxu0 0
    %179 = vmatpush1.bf16.msra.mxu0 0
    %180 = vmatprep.subr.bf16.mxu0 0
    %181 = vmatpush1.bf16.msra.mxu0 0
    %182 = vmatprep.subr.bf16.mxu0 0
    %183 = vmatpush1.bf16.msra.mxu0 0
    %184 = vmatprep.subr.bf16.mxu0 0
    %185 = vmatpush1.bf16.msra.mxu0 0
    %186 = vmatprep.subr.bf16.mxu0 0
    %187 = vmatpush1.bf16.msra.mxu0 0
    %188 = vmatprep.subr.bf16.mxu0 0
    %189 = vmatpush1.bf16.msra.mxu0 0
    %190 = vmatprep.subr.bf16.mxu0 0
    %191 = vmatpush1.bf16.msra.mxu0 0
    %192 = vmatprep.mubr.bf16.mxu0 0
    %193 = vmatmul.mubr.bf16.gmra.mrb[0].mxu0 %v155
    %v194 = vpop.f32.mrb[0].mxu0
    %v195 = vadd.f32 0.0, %v194
    %v196 = vpop.f32.mrb[0].mxu0
    %v197 = vadd.f32 0.0, %v196
    %v198 = vpop.f32.mrb[0].mxu0
    %v199 = vadd.f32 0.0, %v198
    %v200 = vpop.f32.mrb[0].mxu0
    %v201 = vadd.f32 0.0, %v200
    %202 = vmatprep.mubr.bf16.mxu0 0
    %203 = vmatmul.mubr.bf16.gmra.mrb[0].mxu0 %v158
    %v204 = vpop.f32.mrb[0].mxu0
    %v205 = vadd.f32 0.0, %v204
    %v206 = vpop.f32.mrb[0].mxu0
    %v207 = vadd.f32 0.0, %v206
    %v208 = vpop.f32.mrb[0].mxu0
    %v209 = vadd.f32 0.0, %v208
    %v210 = vpop.f32.mrb[0].mxu0
    %v211 = vadd.f32 0.0, %v210
    %212 = vdwg.mxu0
    %213 = vmatprep.subr.bf16.mxu0 0
    %214 = vmatpush1.bf16.msra.mxu0 %v119
    %215 = vmatprep.subr.bf16.mxu0 0
    %216 = vmatpush1.bf16.msra.mxu0 %v122
    %217 = vmatprep.subr.bf16.mxu0 0
    %218 = vmatpush1.bf16.msra.mxu0 %v125
    %219 = vmatprep.subr.bf16.mxu0 0
    %220 = vmatpush1.bf16.msra.mxu0 %v128
    %221 = vmatprep.subr.bf16.mxu0 0
    %222 = vmatpush1.bf16.msra.mxu0 %v131
    %223 = vmatprep.subr.bf16.mxu0 0
    %224 = vmatpush1.bf16.msra.mxu0 %v134
    %225 = vmatprep.subr.bf16.mxu0 0
    %226 = vmatpush1.bf16.msra.mxu0 0
    %227 = vmatprep.subr.bf16.mxu0 0
    %228 = vmatpush1.bf16.msra.mxu0 0
    %229 = vmatprep.subr.bf16.mxu0 0
    %230 = vmatpush1.bf16.msra.mxu0 0
    %231 = vmatprep.subr.bf16.mxu0 0
    %232 = vmatpush1.bf16.msra.mxu0 0
    %233 = vmatprep.subr.bf16.mxu0 0
    %234 = vmatpush1.bf16.msra.mxu0 0
    %235 = vmatprep.subr.bf16.mxu0 0
    %236 = vmatpush1.bf16.msra.mxu0 0
    %237 = vmatprep.subr.bf16.mxu0 0
    %238 = vmatpush1.bf16.msra.mxu0 0
    %239 = vmatprep.subr.bf16.mxu0 0
    %240 = vmatpush1.bf16.msra.mxu0 0
    %241 = vmatprep.subr.bf16.mxu0 0
    %242 = vmatpush1.bf16.msra.mxu0 0
    %243 = vmatprep.subr.bf16.mxu0 0
    %244 = vmatpush1.bf16.msra.mxu0 0
    %245 = vmatprep.mubr.bf16.mxu0 0
    %246 = vmatmul.mubr.bf16.gmra.mrb[0].mxu0 %v155
    %v247 = vpop.f32.mrb[0].mxu0
    %v248 = vadd.f32 0.0, %v247
    %v249 = vpop.f32.mrb[0].mxu0
    %v250 = vpop.f32.mrb[0].mxu0
    %v251 = vadd.f32 0.0, %v250
    %v252 = vpop.f32.mrb[0].mxu0
    %253 = vmatprep.mubr.bf16.mxu0 0
    %254 = vmatmul.mubr.bf16.gmra.mrb[0].mxu0 %v158
    %v255 = vpop.f32.mrb[0].mxu0
    %v256 = vadd.f32 0.0, %v255
    %v257 = vpop.f32.mrb[0].mxu0
    %v258 = vpop.f32.mrb[0].mxu0
    %v259 = vadd.f32 0.0, %v258
    %v260 = vpop.f32.mrb[0].mxu0
    %261 = vdwg.mxu0
    %v262 = vmax.f32 %v195, 0.0
    %v263 = vmax.f32 %v197, 0.0
    %v264 = vmax.f32 %v248, 0.0
    %v265 = vmax.f32 %v199, 0.0
    %v266 = vmax.f32 %v201, 0.0
    %v267 = vmax.f32 %v251, 0.0
    %v268 = vmax.f32 %v205, 0.0
    %v269 = vmax.f32 %v207, 0.0
    %v270 = vmax.f32 %v256, 0.0
    %v271 = vmax.f32 %v209, 0.0
    %v272 = vmax.f32 %v211, 0.0
    %v273 = vmax.f32 %v259, 0.0
    %v274 = vpack.c.bf16 %v265, %v262
    %v275 = vpack.c.bf16 %v266, %v263
    %v276 = vpack.c.bf16 %v267, %v264
    %v277 = vpack.c.bf16 %v271, %v268
    %v278 = vpack.c.bf16 %v272, %v269
    %v279 = vpack.c.bf16 %v273, %v270
    %v280 = vld [vmem:[%s1 + $0x90] sm:$0xf]
    %v281 = vld [vmem:[%s1 + $0x9c] sm:$0xf]
    %v282 = vld [vmem:[%s1 + $0xa8] sm:$0xf]
    %v283 = vld [vmem:[%s1 + $0xb4] sm:$0xf]
    %v284 = vld [vmem:[%s1 + $0xc0] sm:$0xf]
    %v285 = vld [vmem:[%s1 + $0xcc] sm:$0xf]
    %v286 = vld [vmem:[%s1 + $0xd8] sm:$0xf]
    %v287 = vld [vmem:[%s1 + $0xe4] sm:$0xf]
    %v288 = vld [vmem:[%s1 + $0xf0] sm:$0xf]
    %v289 = vld [vmem:[%s1 + $0xfc] sm:$0xf]
    %v290 = vld [vmem:[%s1 + $0x108] sm:$0xf]
    %v291 = vld [vmem:[%s1 + $0x114] sm:$0xf]
    %v292 = vld [vmem:[%s1 + $0x120] sm:$0xf]
    %v293 = vld [vmem:[%s1 + $0x12c] sm:$0xf]
    %v294 = vld [vmem:[%s1 + $0x138] sm:$0xf]
    %v295 = vld [vmem:[%s1 + $0x144] sm:$0xf]
    %v296 = vld [vmem:[%s1 + $0x150] sm:$0xf]
    %v297 = vld [vmem:[%s1 + $0x15c] sm:$0xf]
    %v298 = vld [vmem:[%s1 + $0x168] sm:$0xf]
    %v299 = vld [vmem:[%s1 + $0x174] sm:$0xf]
    %v300 = vld [vmem:[%s1 + $0x180] sm:$0xf]
    %v301 = vld [vmem:[%s1 + $0x18c] sm:$0xf]
    %v302 = vld [vmem:[%s1 + $0x198] sm:$0xf]
    %v303 = vld [vmem:[%s1 + $0x1a4] sm:$0xf]
    %v304 = vld [vmem:[%s1 + $0x1b0] sm:$0xf]
    %v305 = vld [vmem:[%s1 + $0x1bc] sm:$0xf]
    %v306 = vld [vmem:[%s1 + $0x1c8] sm:$0xf]
    %v307 = vld [vmem:[%s1 + $0x1d4] sm:$0xf]
    %v308 = vld [vmem:[%s1 + $0x1e0] sm:$0xf]
    %v309 = vld [vmem:[%s1 + $0x1ec] sm:$0xf]
    %v310 = vld [vmem:[%s1 + $0x1f8] sm:$0xf]
    %v311 = vld [vmem:[%s1 + $0x204] sm:$0xf]
    %v312 = vld [vmem:[%s1 + $0x210] sm:$0xf]
    %v313 = vld [vmem:[%s1 + $0x21c] sm:$0xf]
    %v314 = vld [vmem:[%s1 + $0x228] sm:$0xf]
    %v315 = vld [vmem:[%s1 + $0x234] sm:$0xf]
    %v316 = vld [vmem:[%s2] sm:$0x1]
    %v317 = vlaneseq
    %v318 = vshrl.u32 %v317, 7
    %v319 = vsub.s32 0, %v318
    %v320 = vrot.slane %v316, %v319
    %v357 = vunpack.c.l.b16 %v280
    %v358 = vunpack.c.l.b16 %v281
    %v359 = vunpack.c.l.b16 %v282
    %v360 = vunpack.c.l.b16 %v283
    %v361 = vunpack.c.l.b16 %v284
    %v362 = vunpack.c.l.b16 %v285
    %v363 = vunpack.c.l.b16 %v286
    %v364 = vunpack.c.l.b16 %v287
    %v365 = vunpack.c.l.b16 %v288
    %v366 = vunpack.c.l.b16 %v289
    %v367 = vunpack.c.l.b16 %v290
    %v368 = vunpack.c.l.b16 %v291
    %v369 = vunpack.c.l.b16 %v292
    %v370 = vunpack.c.l.b16 %v293
    %v371 = vunpack.c.l.b16 %v294
    %v372 = vunpack.c.l.b16 %v295
    %v373 = vunpack.c.l.b16 %v296
    %v374 = vunpack.c.l.b16 %v297
    %v375 = vunpack.c.l.b16 %v298
    %v376 = vunpack.c.l.b16 %v299
    %v377 = vunpack.c.l.b16 %v300
    %v378 = vunpack.c.l.b16 %v301
    %v379 = vunpack.c.l.b16 %v302
    %v380 = vunpack.c.l.b16 %v303
    %v381 = vunpack.c.l.b16 %v304
    %v382 = vunpack.c.l.b16 %v305
    %v383 = vunpack.c.l.b16 %v306
    %v384 = vunpack.c.l.b16 %v307
    %v385 = vunpack.c.l.b16 %v308
    %v386 = vunpack.c.l.b16 %v309
    %v387 = vunpack.c.l.b16 %v310
    %v388 = vunpack.c.l.b16 %v311
    %v389 = vunpack.c.l.b16 %v312
    %v390 = vunpack.c.l.b16 %v313
    %v391 = vunpack.c.l.b16 %v314
    %v392 = vunpack.c.l.b16 %v315
    %v393 = vpack.c.b16 %v358, %v357
    %v394 = vpack.c.b16 %v360, %v359
    %v395 = vpack.c.b16 %v362, %v361
    %v396 = vpack.c.b16 %v364, %v363
    %v397 = vpack.c.b16 %v366, %v365
    %v398 = vpack.c.b16 %v368, %v367
    %v399 = vpack.c.b16 %v370, %v369
    %v400 = vpack.c.b16 %v372, %v371
    %v401 = vpack.c.b16 %v374, %v373
    %v402 = vpack.c.b16 %v376, %v375
    %v403 = vpack.c.b16 %v378, %v377
    %v404 = vpack.c.b16 %v380, %v379
    %v405 = vpack.c.b16 %v382, %v381
    %v406 = vpack.c.b16 %v384, %v383
    %v407 = vpack.c.b16 %v386, %v385
    %v408 = vpack.c.b16 %v388, %v387
    %v409 = vpack.c.b16 %v390, %v389
    %v410 = vpack.c.b16 %v392, %v391
    %vm429 = vcmask 261120
    %v431 = vsel %vm429, %v276, 0
    %v434 = vsel %vm429, %v279, 0
    %436 = vmatprep.subr.bf16.mxu0 0
    %437 = vmatpush1.bf16.msra.mxu0 %v393
    %438 = vmatprep.subr.bf16.mxu0 0
    %439 = vmatpush1.bf16.msra.mxu0 %v394
    %440 = vmatprep.subr.bf16.mxu0 0
    %441 = vmatpush1.bf16.msra.mxu0 %v395
    %442 = vmatprep.subr.bf16.mxu0 0
    %443 = vmatpush1.bf16.msra.mxu0 %v396
    %444 = vmatprep.subr.bf16.mxu0 0
    %445 = vmatpush1.bf16.msra.mxu0 %v397
    %446 = vmatprep.subr.bf16.mxu0 0
    %447 = vmatpush1.bf16.msra.mxu0 %v398
    %448 = vmatprep.subr.bf16.mxu0 0
    %449 = vmatpush1.bf16.msra.mxu0 %v399
    %450 = vmatprep.subr.bf16.mxu0 0
    %451 = vmatpush1.bf16.msra.mxu0 %v400
    %452 = vmatprep.subr.bf16.mxu0 0
    %453 = vmatpush1.bf16.msra.mxu0 %v401
    %454 = vmatprep.subr.bf16.mxu0 0
    %455 = vmatpush1.bf16.msra.mxu0 %v402
    %456 = vmatprep.subr.bf16.mxu0 0
    %457 = vmatpush1.bf16.msra.mxu0 %v403
    %458 = vmatprep.subr.bf16.mxu0 0
    %459 = vmatpush1.bf16.msra.mxu0 %v404
    %460 = vmatprep.subr.bf16.mxu0 0
    %461 = vmatpush1.bf16.msra.mxu0 %v405
    %462 = vmatprep.subr.bf16.mxu0 0
    %463 = vmatpush1.bf16.msra.mxu0 %v406
    %464 = vmatprep.subr.bf16.mxu0 0
    %465 = vmatpush1.bf16.msra.mxu0 %v407
    %466 = vmatprep.subr.bf16.mxu0 0
    %467 = vmatpush1.bf16.msra.mxu0 %v408
    %468 = vmatprep.mubr.bf16.mxu0 %v275
    %469 = vmatmul.mubr.bf16.gmra.mrb[0].mxu0 %v274
    %v470 = vpop.f32.mrb[0].mxu0
    %v471 = vadd.f32 %v320, %v470
    %v472 = vpop.f32.mrb[0].mxu0
    %v473 = vpop.f32.mrb[0].mxu0
    %v474 = vadd.f32 %v320, %v473
    %v475 = vpop.f32.mrb[0].mxu0
    %476 = vmatprep.mubr.bf16.mxu0 %v278
    %477 = vmatmul.mubr.bf16.gmra.mrb[0].mxu0 %v277
    %v478 = vpop.f32.mrb[0].mxu0
    %v479 = vadd.f32 %v320, %v478
    %v480 = vpop.f32.mrb[0].mxu0
    %v481 = vpop.f32.mrb[0].mxu0
    %v482 = vadd.f32 %v320, %v481
    %v483 = vpop.f32.mrb[0].mxu0
    %484 = vdwg.mxu0
    %485 = vmatprep.subr.bf16.mxu0 0
    %486 = vmatpush1.bf16.msra.mxu0 %v409
    %487 = vmatprep.subr.bf16.mxu0 0
    %488 = vmatpush1.bf16.msra.mxu0 %v410
    %489 = vmatprep.subr.bf16.mxu0 0
    %490 = vmatpush1.bf16.msra.mxu0 0
    %491 = vmatprep.subr.bf16.mxu0 0
    %492 = vmatpush1.bf16.msra.mxu0 0
    %493 = vmatprep.subr.bf16.mxu0 0
    %494 = vmatpush1.bf16.msra.mxu0 0
    %495 = vmatprep.subr.bf16.mxu0 0
    %496 = vmatpush1.bf16.msra.mxu0 0
    %497 = vmatprep.subr.bf16.mxu0 0
    %498 = vmatpush1.bf16.msra.mxu0 0
    %499 = vmatprep.subr.bf16.mxu0 0
    %500 = vmatpush1.bf16.msra.mxu0 0
    %501 = vmatprep.subr.bf16.mxu0 0
    %502 = vmatpush1.bf16.msra.mxu0 0
    %503 = vmatprep.subr.bf16.mxu0 0
    %504 = vmatpush1.bf16.msra.mxu0 0
    %505 = vmatprep.subr.bf16.mxu0 0
    %506 = vmatpush1.bf16.msra.mxu0 0
    %507 = vmatprep.subr.bf16.mxu0 0
    %508 = vmatpush1.bf16.msra.mxu0 0
    %509 = vmatprep.subr.bf16.mxu0 0
    %510 = vmatpush1.bf16.msra.mxu0 0
    %511 = vmatprep.subr.bf16.mxu0 0
    %512 = vmatpush1.bf16.msra.mxu0 0
    %513 = vmatprep.subr.bf16.mxu0 0
    %514 = vmatpush1.bf16.msra.mxu0 0
    %515 = vmatprep.subr.bf16.mxu0 0
    %516 = vmatpush1.bf16.msra.mxu0 0
    %517 = vmatprep.mubr.bf16.mxu0 0
    %518 = vmatmul.mubr.bf16.gmra.mrb[0].mxu0 %v431
    %v519 = vpop.f32.mrb[0].mxu0
    %v520 = vadd.f32 %v471, %v519
    %v521 = vpop.f32.mrb[0].mxu0
    %v522 = vpop.f32.mrb[0].mxu0
    %v523 = vadd.f32 %v474, %v522
    %v524 = vpop.f32.mrb[0].mxu0
    %525 = vmatprep.mubr.bf16.mxu0 0
    %526 = vmatmul.mubr.bf16.gmra.mrb[0].mxu0 %v434
    %v527 = vpop.f32.mrb[0].mxu0
    %v528 = vadd.f32 %v479, %v527
    %v529 = vpop.f32.mrb[0].mxu0
    %v530 = vpop.f32.mrb[0].mxu0
    %v531 = vadd.f32 %v482, %v530
    %v532 = vpop.f32.mrb[0].mxu0
    %533 = vdwg.mxu0
    %v534 = vmax.f32 %v520, 0.0
    %v535 = vmax.f32 %v523, 0.0
    %v536 = vmax.f32 %v528, 0.0
    %v537 = vmax.f32 %v531, 0.0
    %vm538 = vcmask 523264
    %v539 = vsel %vm538, %v534, 0.0
    %v540 = vsel %vm538, %v535, 0.0
    %v541 = vadd.f32 %v539, %v540
    %v542 = vrot.slane %v541, 4
    %v543 = vadd.f32 %v541, %v542
    %v544 = vrot.slane %v543, 2
    %v545 = vadd.f32 %v543, %v544
    %v546 = vrot.slane %v545, 1
    %v547 = vadd.f32 %v545, %v546
    %v548 = vsel %vm538, %v536, 0.0
    %v549 = vsel %vm538, %v537, 0.0
    %v550 = vadd.f32 %v548, %v549
    %v551 = vrot.slane %v550, 4
    %v552 = vadd.f32 %v550, %v551
    %v553 = vrot.slane %v552, 2
    %v554 = vadd.f32 %v552, %v553
    %v555 = vrot.slane %v554, 1
    %v556 = vadd.f32 %v554, %v555
    %vm557 = vcmask 1040384
    %v558 = vsel %vm557, %v547, %v556
    %v559 = vmul.f32 %v558, 0.0625
    %v560 = vpack.c.bf16 %v559, %v559
    %v561 = vld [vmem:[%s1 + $0x240] sm:$0xf]
    %v562 = vld [vmem:[%s1 + $0x24c] sm:$0xf]
    %v563 = vld [vmem:[%s1 + $0x258] sm:$0xf]
    %v564 = vld [vmem:[%s1 + $0x264] sm:$0xf]
    %v565 = vld [vmem:[%s1 + $0x270] sm:$0xf]
    %v566 = vld [vmem:[%s1 + $0x27c] sm:$0xf]
    %v567 = vld [vmem:[%s1 + $0x288] sm:$0xf]
    %v568 = vld [vmem:[%s1 + $0x294] sm:$0xf]
    %v569 = vld [vmem:[%s2 + $0x1] sm:$0x1]
    %v570 = vlaneseq
    %v571 = vshrl.u32 %v570, 7
    %v572 = vsub.s32 0, %v571
    %v573 = vrot.slane %v569, %v572
    %v582 = vunpack.c.l.b16 %v561
    %v583 = vunpack.c.l.b16 %v562
    %v584 = vunpack.c.l.b16 %v563
    %v585 = vunpack.c.l.b16 %v564
    %v586 = vunpack.c.l.b16 %v565
    %v587 = vunpack.c.l.b16 %v566
    %v588 = vunpack.c.l.b16 %v567
    %v589 = vunpack.c.l.b16 %v568
    %v590 = vpack.c.b16 %v583, %v582
    %v591 = vpack.c.b16 %v585, %v584
    %v592 = vpack.c.b16 %v587, %v586
    %v593 = vpack.c.b16 %v589, %v588
    %v599 = vsel %vm538, %v560, 0
    %601 = vmatprep.subr.bf16.mxu0 0
    %602 = vmatpush1.bf16.msra.mxu0 %v590
    %603 = vmatprep.subr.bf16.mxu0 0
    %604 = vmatpush1.bf16.msra.mxu0 %v591
    %605 = vmatprep.subr.bf16.mxu0 0
    %606 = vmatpush1.bf16.msra.mxu0 %v592
    %607 = vmatprep.subr.bf16.mxu0 0
    %608 = vmatpush1.bf16.msra.mxu0 %v593
    %609 = vmatprep.subr.bf16.mxu0 0
    %610 = vmatpush1.bf16.msra.mxu0 0
    %611 = vmatprep.subr.bf16.mxu0 0
    %612 = vmatpush1.bf16.msra.mxu0 0
    %613 = vmatprep.subr.bf16.mxu0 0
    %614 = vmatpush1.bf16.msra.mxu0 0
    %615 = vmatprep.subr.bf16.mxu0 0
    %616 = vmatpush1.bf16.msra.mxu0 0
    %617 = vmatprep.subr.bf16.mxu0 0
    %618 = vmatpush1.bf16.msra.mxu0 0
    %619 = vmatprep.subr.bf16.mxu0 0
    %620 = vmatpush1.bf16.msra.mxu0 0
    %621 = vmatprep.subr.bf16.mxu0 0
    %622 = vmatpush1.bf16.msra.mxu0 0
    %623 = vmatprep.subr.bf16.mxu0 0
    %624 = vmatpush1.bf16.msra.mxu0 0
    %625 = vmatprep.subr.bf16.mxu0 0
    %626 = vmatpush1.bf16.msra.mxu0 0
    %627 = vmatprep.subr.bf16.mxu0 0
    %628 = vmatpush1.bf16.msra.mxu0 0
    %629 = vmatprep.subr.bf16.mxu0 0
    %630 = vmatpush1.bf16.msra.mxu0 0
    %631 = vmatprep.subr.bf16.mxu0 0
    %632 = vmatpush1.bf16.msra.mxu0 0
    %633 = vmatprep.mubr.bf16.mxu0 0
    %634 = vmatmul.mubr.bf16.gmra.mrb[0].mxu0 %v599
    %v635 = vpop.f32.mrb[0].mxu0
    %v636 = vadd.f32 %v573, %v635
    %v637 = vpop.f32.mrb[0].mxu0
    %v638 = vpop.f32.mrb[0].mxu0
    %v639 = vpop.f32.mrb[0].mxu0
    %640 = vdwg.mxu0
    %v641 = vmul.f32 %v636, %v636
    %vm642 = vcmask 1041408
    %v643 = vsel %vm642, %v641, 0.0
    %644 = vadd.xlane.f32.xlu0 %v643
    %v645 = vpop.xlane.xlu0 %644
    %v646 = vmax.f32 %v645, 1e-24
    %v647 = vrsqrt.pop %v646
    %v648 = vmul.f32 %v636, %v647
    %649 = vst [vmem:[#allocation2] sm:$0x3] %v648
    %v650 = vld [vmem:[%s2 + $0x2] sm:$0x3]
    %v651 = vsub.f32 %v648, %v650
    %v652 = vmul.f32 %v651, %v651
    %v653 = vsel %vm642, %v652, 0.0
    %654 = vadd.xlane.f32.xlu0 %v653
    %v655 = vpop.xlane.xlu0 %654
    %v656 = vrot.slane %v655, 4
    %v657 = vadd.f32 %v655, %v656
    %v658 = vrot.slane %v657, 2
    %v659 = vadd.f32 %v657, %v658
    %v660 = vrot.slane %v659, 1
    %v661 = vadd.f32 %v659, %v660
    %s662 = vtos %v661
    %v663 = vstv %s662
    %v664 = vmul.f32 %v663, 0.015625
    %vm665 = vcmask 0
    %666 = vst.msk [vmem:[#allocation4] sm:$0x1] %vm665, %v664
    // Predicated region
    $region14: #{touch_embnet2dml_forward.1} parent=1 // pred_check
      _
    $region15: #{touch_embnet2dml_forward.1} parent=1 // pred_check_branch
      %668 = sbr.rel (0) target = $region17
    $region16: #{touch_embnet2dml_forward.1} parent=1 // pred_region
      %s670 = ssub.s32 32, 32
      %671 = vsyncadd [#allocation3], %s670
      %s673 = sshll.u32 [#allocation2], 4
      %s674 = int_to_ptr.vmem [resolvable:$true] %s673
      %676 = dma.vmem_to_hbm [thread:$0]  %s674, 32, %s3, [#allocation3]
    $region17: #{touch_embnet2dml_forward.1} parent=1 // pred_fallthru
      _
    // Predicated region
    $region18: #{touch_embnet2dml_forward.1} parent=1 // pred_check
      _
    $region19: #{touch_embnet2dml_forward.1} parent=1 // pred_check_branch
      %678 = sbr.rel (0) target = $region21
    $region20: #{touch_embnet2dml_forward.1} parent=1 // pred_region
      %s680 = ssub.s32 16, 16
      %681 = vsyncadd [#allocation5], %s680
      %s683 = sshll.u32 [#allocation4], 4
      %s684 = int_to_ptr.vmem [resolvable:$true] %s683
      %686 = dma.vmem_to_hbm [thread:$0]  %s684, 16, %s4, [#allocation5]
    $region21: #{touch_embnet2dml_forward.1} parent=1 // pred_fallthru
      _
    // Predicated region
    $region22: #{touch_embnet2dml_forward.1} parent=1 // pred_check
      _
    $region23: #{touch_embnet2dml_forward.1} parent=1 // pred_check_branch
      %688 = sbr.rel (0) target = $region25
    $region24: #{touch_embnet2dml_forward.1} parent=1 // pred_region
      %689 = dma.done [#allocation3], 32
    $region25: #{touch_embnet2dml_forward.1} parent=1 // pred_fallthru
      _
    // Predicated region
    $region26: #{touch_embnet2dml_forward.1} parent=1 // pred_check
      _
    $region27: #{touch_embnet2dml_forward.1} parent=1 // pred_check_branch
      %691 = sbr.rel (0) target = $region29
    $region28: #{touch_embnet2dml_forward.1} parent=1 // pred_region
      %692 = dma.done [#allocation5], 16
    $region29: #{touch_embnet2dml_forward.1} parent=1 // pred_fallthru
      _
    %693 = vsyncpa [#allocation3], 1
    %694 = vsyncpa [#allocation5], 1

</llo_original>
